<compile_context>
chip_gen: v6e
topology: v6e:2x2x1
jax: 0.10.0
libtpu: 0.0.40
codegen_flags: <defaults>
</compile_context>

<pallas_src>
import functools

import jax
import jax.numpy as jnp
from jax.experimental import pallas as pl
from jax.experimental.pallas import tpu as pltpu

BN_EPS = 1e-5


def _round_up(x, m):
    return (x + m - 1) // m * m


def _default_batch_splits():
    """2-way batch grid on v7x (2 TensorCores/chip), single step elsewhere."""
    try:
        kind = jax.devices()[0].device_kind.lower().replace(" ", "")
    except Exception:
        return 1
    return 2 if ("v7" in kind or "tpu7" in kind) else 1


# ----------------------------------------------------------------------------- kernel
def drowsiness_kernel(x_ref, w_ref, v_ref, out_ref):
    """x_ref: (TB, F_in); w_ref: (F8+256, 128) weight slab; v_ref: (8, 128) vector slab;
    out_ref: (1, TB) transposed lane-dense logits."""
    f_in = x_ref.shape[1]
    f8 = w_ref.shape[0] - 256          # padded row count of the w1 region

    h = x_ref[...]                                                        # (TB, F_in)
    # fc1 + bn1 (folded) + relu   (dropout1 = identity in eval)
    h = jnp.maximum(
        jnp.dot(h, w_ref[0:f_in, :], preferred_element_type=jnp.float32)
        + v_ref[0:1, :], 0.0)                                             # (TB, 128) tail lanes = 0
    # fc2 + bn2 (folded) + relu
    h = jnp.maximum(
        jnp.dot(h, w_ref[f8:f8 + 128, :], preferred_element_type=jnp.float32)
        + v_ref[1:2, :], 0.0)                                             # (TB, 128)
    # fc3 + bn3 (folded) + relu
    h = jnp.maximum(
        jnp.dot(h, w_ref[f8 + 128:f8 + 256, :], preferred_element_type=jnp.float32)
        + v_ref[2:3, :], 0.0)                                             # (TB, 128) tail lanes = 0
    # fc4 (64 -> 1): w4 row @ h.T gives the (1, TB) logit row directly
    # (zero-padded tail lanes of w4/h contribute exactly 0).
    w4 = v_ref[3:4, :]                                                    # (1, 128)
    b4 = v_ref[4:5, 0:1]                                                  # (1, 1)
    row = jnp.dot(w4, h.T, preferred_element_type=jnp.float32) + b4       # (1, TB)
    out_ref[...] = row.astype(out_ref.dtype)


# ----------------------------------------------------------------------------- wrapper
@functools.partial(jax.jit, static_argnums=(3,))
def _forward(x, w_slab, v_slab, num_batch_splits):
    B, F_in = x.shape
    Bp = _round_up(B, 8)
    TB = Bp
    if num_batch_splits > 1:
        cand = Bp // num_batch_splits
        # only split if tiles stay lane-dense (multiple of 128) and cover Bp exactly
        if cand * num_batch_splits == Bp and cand % 128 == 0:
            TB = cand
    if Bp != B:
        x = jnp.pad(x, ((0, Bp - B), (0, 0)))   # tiny: only up to 7 rows

    flops = 2 * Bp * (F_in * 64 + 64 * 128 + 128 * 64 + 64)
    bytes_accessed = 4 * (Bp * F_in + w_slab.size + v_slab.size + Bp)

    out = pl.pallas_call(
        drowsiness_kernel,
        out_shape=jax.ShapeDtypeStruct((1, Bp), jnp.float32),
        grid=(Bp // TB,),
        in_specs=[
            pl.BlockSpec((TB, F_in), lambda i: (i, 0)),        # batch-tiled activations
            pl.BlockSpec(w_slab.shape, lambda i: (0, 0)),      # VMEM-resident weight slab
            pl.BlockSpec(v_slab.shape, lambda i: (0, 0)),      # VMEM-resident bias/w4 slab
        ],
        out_specs=pl.BlockSpec((1, TB), lambda i: (0, i)),     # transposed, lane-dense
        compiler_params=pltpu.CompilerParams(dimension_semantics=("parallel",)),
        cost_estimate=pl.CostEstimate(flops=flops, transcendentals=0,
                                      bytes_accessed=bytes_accessed),
    )(x, w_slab, v_slab)

    return out[0, :B][:, None]


def drowsiness_net(x, folded, *, num_batch_splits=None):
    """x: (B, F_in) f32. folded: dict from fold_params()."""
    if num_batch_splits is None:
        num_batch_splits = _default_batch_splits()
    return _forward(x, folded["w_slab"], folded["v_slab"], int(num_batch_splits))


# ----------------------------------------------------------------------------- params
def init_params(key, input_features):
    """Deterministic synthetic parameters mirroring the PyTorch module's shapes."""
    dims = [(input_features, 64), (64, 128), (128, 64), (64, 1)]
    params = {}
    keys = jax.random.split(key, 16)
    ki = 0
    for li, (fin, fout) in enumerate(dims, start=1):
        bound = 1.0 / jnp.sqrt(jnp.float32(fin))
        params[f"w{li}"] = jax.random.uniform(            # stored transposed: (in, out)
            keys[ki], (fin, fout), jnp.float32, -bound, bound); ki += 1
        params[f"b{li}"] = jax.random.uniform(
            keys[ki], (1, fout), jnp.float32, -bound, bound); ki += 1
        if li < 4:  # BatchNorm1d after fc1/fc2/fc3
            params[f"g{li}"] = 1.0 + 0.1 * jax.random.normal(keys[ki], (1, fout), jnp.float32); ki += 1
            params[f"be{li}"] = 0.05 * jax.random.normal(keys[ki], (1, fout), jnp.float32); ki += 1
            params[f"m{li}"] = 0.02 * jnp.arange(fout, dtype=jnp.float32).reshape(1, fout) / fout
            params[f"v{li}"] = 1.0 + 0.01 * jnp.arange(fout, dtype=jnp.float32).reshape(1, fout) / fout
    return params


def fold_params(params):
    """Fold eval-mode BN into the Linears and pack everything into two VMEM slabs.
    Done once, outside the hot path."""
    def bn_fold(li):
        scale = params[f"g{li}"] * jax.lax.rsqrt(params[f"v{li}"] + BN_EPS)   # (1, fout)
        shift = params[f"be{li}"] - params[f"m{li}"] * scale
        return params[f"w{li}"] * scale, params[f"b{li}"] * scale + shift

    w1, b1 = bn_fold(1)          # (F_in, 64), (1, 64)
    w2, b2 = bn_fold(2)          # (64, 128),  (1, 128)
    w3, b3 = bn_fold(3)          # (128, 64),  (1, 64)
    w4, b4 = params["w4"], params["b4"]   # (64, 1), (1, 1)

    f_in = w1.shape[0]
    f8 = _round_up(f_in, 8)

    def pad_to(a, rows, cols):
        return jnp.pad(a, ((0, rows - a.shape[0]), (0, cols - a.shape[1])))

    # Weight slab: [w1 (rows 0:F8) | w2 (rows F8:F8+128) | w3 (rows F8+128:F8+256)],
    # each zero-padded to 128 lanes. Padded lanes/rows contribute exactly 0.
    w_slab = jnp.concatenate(
        [pad_to(w1, f8, 128), pad_to(w2, 128, 128), pad_to(w3, 128, 128)], axis=0)

    # Vector slab rows: 0=b1, 1=b2, 2=b3, 3=w4 (as a row), 4[0]=b4.
    v_slab = jnp.zeros((8, 128), jnp.float32)
    v_slab = v_slab.at[0, :64].set(b1[0])
    v_slab = v_slab.at[1, :].set(b2[0])
    v_slab = v_slab.at[2, :64].set(b3[0])
    v_slab = v_slab.at[3, :64].set(w4[:, 0])
    v_slab = v_slab.at[4, 0].set(b4[0, 0])
    return {"w_slab": w_slab, "v_slab": v_slab}


def reference_forward(x, params):
    """Plain-JAX reference with the ORIGINAL (unfolded) parameters."""
    h = x
    for li in (1, 2, 3):
        h = h @ params[f"w{li}"] + params[f"b{li}"]
        scale = params[f"g{li}"] / jnp.sqrt(params[f"v{li}"] + BN_EPS)
        h = (h - params[f"m{li}"]) * scale + params[f"be{li}"]
        h = jnp.maximum(h, 0.0)
    return h @ params["w4"] + params["b4"]


# ----------------------------------------------------------------------------- main
if __name__ == "__main__":
    B = 256               # batch (single grid step on v5e/v6e, 2-way on v7x)
    IN_FEATURES = 32      # input_features_count

    key = jax.random.PRNGKey(0)
    kx, kp = jax.random.split(key)
    x = jax.random.normal(kx, (B, IN_FEATURES), jnp.float32)
    params = init_params(kp, IN_FEATURES)
    folded = fold_params(params)   # one-time prep, not per call

    out = drowsiness_net(x, folded)
    out = jax.block_until_ready(out)

    ref = reference_forward(x, params)
    assert out.shape == (B, 1), out.shape
    assert jnp.allclose(out, ref, atol=1e-3, rtol=1e-3), (
        float(jnp.max(jnp.abs(out - ref))))

    print("KERNEL_OK")
</pallas_src>

<mosaic_0001>
module attributes {stable_mosaic.version = 11 : i64} {
  func.func @drowsiness_kernel(%arg0: i32, %arg1: memref<256x32xf32, #tpu.memory_space<vmem>>, %arg2: memref<288x128xf32, #tpu.memory_space<vmem>>, %arg3: memref<8x128xf32, #tpu.memory_space<vmem>>, %arg4: memref<1x256xf32, #tpu.memory_space<vmem>>) attributes {dimension_semantics = [#tpu.dimension_semantics<parallel>], iteration_bounds = array<i64: 1>, scalar_prefetch = 0 : i64, scratch_operands = 0 : i64, tpu.core_type = #tpu.core_type<tc>, window_params = [{transform_indices = @transform_0, window_bounds = array<i64: 256, 32>}, {pipeline_mode = #tpu.pipeline_mode<synchronous>, transform_indices = @transform_1, window_bounds = array<i64: 288, 128>}, {pipeline_mode = #tpu.pipeline_mode<synchronous>, transform_indices = @transform_2, window_bounds = array<i64: 8, 128>}, {transform_indices = @transform_3, window_bounds = array<i64: 1, 256>}]} {
    %c0 = arith.constant 0 : index
    %c0_0 = arith.constant 0 : index
    %0 = vector.load %arg1[%c0, %c0_0] : memref<256x32xf32, #tpu.memory_space<vmem>>, vector<256x32xf32>
    %c0_1 = arith.constant 0 : index
    %c0_2 = arith.constant 0 : index
    %1 = vector.load %arg2[%c0_1, %c0_2] : memref<288x128xf32, #tpu.memory_space<vmem>>, vector<32x128xf32>
    %cst = arith.constant dense<0.000000e+00> : vector<256x128xf32>
    %2 = tpu.matmul %0, %1, %cst {dimension_numbers = #tpu.dot_dimension_numbers<[1], [0], [0], [1], [0, 0, 1, 1], [], []>} : vector<256x32xf32>, vector<32x128xf32>, vector<256x128xf32> -> vector<256x128xf32>
    %c0_3 = arith.constant 0 : index
    %c0_4 = arith.constant 0 : index
    %3 = vector.load %arg3[%c0_3, %c0_4] : memref<8x128xf32, #tpu.memory_space<vmem>>, vector<1x128xf32>
    %4 = vector.broadcast %3 : vector<1x128xf32> to vector<256x128xf32>
    %5 = arith.addf %2, %4 : vector<256x128xf32>
    %cst_5 = arith.constant 0.000000e+00 : f32
    %6 = vector.broadcast %cst_5 : f32 to vector<256x128xf32>
    %7 = arith.maximumf %5, %6 : vector<256x128xf32>
    %c32 = arith.constant 32 : index
    %c0_6 = arith.constant 0 : index
    %8 = vector.load %arg2[%c32, %c0_6] : memref<288x128xf32, #tpu.memory_space<vmem>>, vector<128x128xf32>
    %cst_7 = arith.constant dense<0.000000e+00> : vector<256x128xf32>
    %9 = tpu.matmul %7, %8, %cst_7 {dimension_numbers = #tpu.dot_dimension_numbers<[1], [0], [0], [1], [0, 0, 1, 1], [], []>} : vector<256x128xf32>, vector<128x128xf32>, vector<256x128xf32> -> vector<256x128xf32>
    %c1 = arith.constant 1 : index
    %c0_8 = arith.constant 0 : index
    %10 = vector.load %arg3[%c1, %c0_8] : memref<8x128xf32, #tpu.memory_space<vmem>>, vector<1x128xf32>
    %11 = vector.broadcast %10 : vector<1x128xf32> to vector<256x128xf32>
    %12 = arith.addf %9, %11 : vector<256x128xf32>
    %cst_9 = arith.constant 0.000000e+00 : f32
    %13 = vector.broadcast %cst_9 : f32 to vector<256x128xf32>
    %14 = arith.maximumf %12, %13 : vector<256x128xf32>
    %c160 = arith.constant 160 : index
    %c0_10 = arith.constant 0 : index
    %15 = vector.load %arg2[%c160, %c0_10] : memref<288x128xf32, #tpu.memory_space<vmem>>, vector<128x128xf32>
    %cst_11 = arith.constant dense<0.000000e+00> : vector<256x128xf32>
    %16 = tpu.matmul %14, %15, %cst_11 {dimension_numbers = #tpu.dot_dimension_numbers<[1], [0], [0], [1], [0, 0, 1, 1], [], []>} : vector<256x128xf32>, vector<128x128xf32>, vector<256x128xf32> -> vector<256x128xf32>
    %c2 = arith.constant 2 : index
    %c0_12 = arith.constant 0 : index
    %17 = vector.load %arg3[%c2, %c0_12] : memref<8x128xf32, #tpu.memory_space<vmem>>, vector<1x128xf32>
    %18 = vector.broadcast %17 : vector<1x128xf32> to vector<256x128xf32>
    %19 = arith.addf %16, %18 : vector<256x128xf32>
    %cst_13 = arith.constant 0.000000e+00 : f32
    %20 = vector.broadcast %cst_13 : f32 to vector<256x128xf32>
    %21 = arith.maximumf %19, %20 : vector<256x128xf32>
    %c3 = arith.constant 3 : index
    %c0_14 = arith.constant 0 : index
    %22 = vector.load %arg3[%c3, %c0_14] : memref<8x128xf32, #tpu.memory_space<vmem>>, vector<1x128xf32>
    %c4 = arith.constant 4 : index
    %c0_15 = arith.constant 0 : index
    %23 = vector.load %arg3[%c4, %c0_15] : memref<8x128xf32, #tpu.memory_space<vmem>>, vector<1x1xf32>
    %24 = tpu.transpose %21, [1, 0] : vector<256x128xf32> -> vector<128x256xf32>
    %cst_16 = arith.constant dense<0.000000e+00> : vector<1x256xf32>
    %25 = tpu.matmul %22, %24, %cst_16 {dimension_numbers = #tpu.dot_dimension_numbers<[1], [0], [0], [1], [0, 0, 1, 1], [], []>} : vector<1x128xf32>, vector<128x256xf32>, vector<1x256xf32> -> vector<1x256xf32>
    %26 = vector.broadcast %23 : vector<1x1xf32> to vector<1x256xf32>
    %27 = arith.addf %25, %26 : vector<1x256xf32>
    %c0_17 = arith.constant 0 : index
    %c0_18 = arith.constant 0 : index
    %28 = vector.load %arg4[%c0_17, %c0_18] : memref<1x256xf32, #tpu.memory_space<vmem>>, vector<1x256xf32>
    tpu.vector_store %arg4[%c0_17, %c0_18], %27 {strides = array<i32>} : memref<1x256xf32, #tpu.memory_space<vmem>>, vector<1x256xf32>,
    return
  }
  func.func @transform_0(%arg0: i32) -> (i32, i32) {
    %c0_i32 = arith.constant 0 : i32
    %c0_i32_0 = arith.constant 0 : i32
    return %arg0, %c0_i32 : i32, i32
  }
  func.func @transform_1(%arg0: i32) -> (i32, i32) {
    %c0_i32 = arith.constant 0 : i32
    %c0_i32_0 = arith.constant 0 : i32
    %c0_i32_1 = arith.constant 0 : i32
    return %c0_i32, %c0_i32_0 : i32, i32
  }
  func.func @transform_2(%arg0: i32) -> (i32, i32) {
    %c0_i32 = arith.constant 0 : i32
    %c0_i32_0 = arith.constant 0 : i32
    %c0_i32_1 = arith.constant 0 : i32
    return %c0_i32, %c0_i32_0 : i32, i32
  }
  func.func @transform_3(%arg0: i32) -> (i32, i32) {
    %c0_i32 = arith.constant 0 : i32
    %c0_i32_0 = arith.constant 0 : i32
    return %c0_i32, %arg0 : i32, i32
  }
}

</mosaic_0001>

<llo_original>
// kernel: _forward.1
$region0: #{_forward.1}
  #allocation0 [shape = 'u32[]', space=smem, size = 0x4, offset = 0x4, fixed_abs, tag = 'smem constant byte address 0x4 - core index']
  #allocation1 [shape = 'u32[144,128]{1,0:T(1,128)}', space=vmem, size = 0x12000, scoped, tag = 'internal scratch']
  %s0 = inlined_call_operand.vmem [shape: f32[256,32], index: 0, kind: input, shape index: {}]
  %s1 = inlined_call_operand.vmem [shape: f32[288,128], index: 1, kind: input, shape index: {}]
  %s2 = inlined_call_operand.vmem [shape: f32[8,128], index: 2, kind: input, shape index: {}]
  %s3 = inlined_call_operand.hbm [shape: f32[1,256], index: 3, kind: output, shape index: {}]
  %s4 = sld [smem:[#allocation0]]
  $region22: #{_forward.1} parent=0
    _
  %s6 = ssub.s32 1, %s4
  %s7 = scalar_select 0, %s6, %s4
  $region1: #{_forward.1} parent=0
    #allocation2 [shape = 'u8[1024]{0}', space=vmem, size = 0x400, scoped, tag = 'output window, operand 0, single buffered']
    #allocation3 [shape = 's32[1]{0}', space=sflag, size = 0x4, scoped, tag = 'scoped memory for _forward.1']
    %8 = vsyncpa [#allocation3], 0
    // Predicated region
    $region2: #{_forward.1} parent=1 // pred_check
      _
    $region3: #{_forward.1} parent=1 // pred_check_branch
      %10 = sbr.rel (0) target = $region5
    $region4: #{_forward.1} parent=1 // pred_region
      _
    $region5: #{_forward.1} parent=1 // pred_fallthru
      _
    // Predicated region
    $region6: #{_forward.1} parent=1 // pred_check
      _
    $region7: #{_forward.1} parent=1 // pred_check_branch
      %12 = sbr.rel (0) target = $region9
    $region8: #{_forward.1} parent=1 // pred_region
      _
    $region9: #{_forward.1} parent=1 // pred_fallthru
      _
    // Predicated region
    $region10: #{_forward.1} parent=1 // pred_check
      _
    $region11: #{_forward.1} parent=1 // pred_check_branch
      %14 = sbr.rel (0) target = $region13
    $region12: #{_forward.1} parent=1 // pred_region
      _
    $region13: #{_forward.1} parent=1 // pred_fallthru
      _
    %v15 = vld [vmem:[%s0] sm:$0xff]
    %v16 = vld [vmem:[%s0 + $0x8] sm:$0xff]
    %v17 = vld [vmem:[%s0 + $0x10] sm:$0xff]
    %v18 = vld [vmem:[%s0 + $0x18] sm:$0xff]
    %v19 = vld [vmem:[%s0 + $0x20] sm:$0xff]
    %v20 = vld [vmem:[%s0 + $0x28] sm:$0xff]
    %v21 = vld [vmem:[%s0 + $0x30] sm:$0xff]
    %v22 = vld [vmem:[%s0 + $0x38] sm:$0xff]
    %v23 = vld [vmem:[%s0 + $0x40] sm:$0xff]
    %v24 = vld [vmem:[%s0 + $0x48] sm:$0xff]
    %v25 = vld [vmem:[%s0 + $0x50] sm:$0xff]
    %v26 = vld [vmem:[%s0 + $0x58] sm:$0xff]
    %v27 = vld [vmem:[%s0 + $0x60] sm:$0xff]
    %v28 = vld [vmem:[%s0 + $0x68] sm:$0xff]
    %v29 = vld [vmem:[%s0 + $0x70] sm:$0xff]
    %v30 = vld [vmem:[%s0 + $0x78] sm:$0xff]
    %v31 = vld [vmem:[%s0 + $0x80] sm:$0xff]
    %v32 = vld [vmem:[%s0 + $0x88] sm:$0xff]
    %v33 = vld [vmem:[%s0 + $0x90] sm:$0xff]
    %v34 = vld [vmem:[%s0 + $0x98] sm:$0xff]
    %v35 = vld [vmem:[%s0 + $0xa0] sm:$0xff]
    %v36 = vld [vmem:[%s0 + $0xa8] sm:$0xff]
    %v37 = vld [vmem:[%s0 + $0xb0] sm:$0xff]
    %v38 = vld [vmem:[%s0 + $0xb8] sm:$0xff]
    %v39 = vld [vmem:[%s0 + $0xc0] sm:$0xff]
    %v40 = vld [vmem:[%s0 + $0xc8] sm:$0xff]
    %v41 = vld [vmem:[%s0 + $0xd0] sm:$0xff]
    %v42 = vld [vmem:[%s0 + $0xd8] sm:$0xff]
    %v43 = vld [vmem:[%s0 + $0xe0] sm:$0xff]
    %v44 = vld [vmem:[%s0 + $0xe8] sm:$0xff]
    %v45 = vld [vmem:[%s0 + $0xf0] sm:$0xff]
    %v46 = vld [vmem:[%s0 + $0xf8] sm:$0xff]
    %v47 = vld [vmem:[%s1] sm:$0xff]
    %v48 = vld [vmem:[%s1 + $0x8] sm:$0xff]
    %v49 = vld [vmem:[%s1 + $0x10] sm:$0xff]
    %v50 = vld [vmem:[%s1 + $0x18] sm:$0xff]
    %v51 = vld [vmem:[%s2] sm:$0x1]
    %v52 = vlaneseq
    %v53 = vshrl.u32 %v52, 7
    %v54 = vsub.s32 0, %v53
    %v55 = vrot.slane %v51, %v54
    %vm56 = vcmask 261120
    %v58 = vsel %vm56, %v15, 0
    %v61 = vsel %vm56, %v16, 0
    %v64 = vsel %vm56, %v17, 0
    %v67 = vsel %vm56, %v18, 0
    %v70 = vsel %vm56, %v19, 0
    %v73 = vsel %vm56, %v20, 0
    %v76 = vsel %vm56, %v21, 0
    %v79 = vsel %vm56, %v22, 0
    %v82 = vsel %vm56, %v23, 0
    %v85 = vsel %vm56, %v24, 0
    %v88 = vsel %vm56, %v25, 0
    %v91 = vsel %vm56, %v26, 0
    %v94 = vsel %vm56, %v27, 0
    %v97 = vsel %vm56, %v28, 0
    %v100 = vsel %vm56, %v29, 0
    %v103 = vsel %vm56, %v30, 0
    %v106 = vsel %vm56, %v31, 0
    %v109 = vsel %vm56, %v32, 0
    %v112 = vsel %vm56, %v33, 0
    %v115 = vsel %vm56, %v34, 0
    %v118 = vsel %vm56, %v35, 0
    %v121 = vsel %vm56, %v36, 0
    %v124 = vsel %vm56, %v37, 0
    %v127 = vsel %vm56, %v38, 0
    %v130 = vsel %vm56, %v39, 0
    %v133 = vsel %vm56, %v40, 0
    %v136 = vsel %vm56, %v41, 0
    %v139 = vsel %vm56, %v42, 0
    %v142 = vsel %vm56, %v43, 0
    %v145 = vsel %vm56, %v44, 0
    %v148 = vsel %vm56, %v45, 0
    %v151 = vsel %vm56, %v46, 0
    %153 = vmatprep.subr.mxu0 0.0
    %154 = vmatpush1.msra.mxu0 0.0
    %155 = vmatprep.subr.mxu0 0.0
    %156 = vmatpush1.msra.mxu0 0.0
    %157 = vmatprep.subr.mxu0 0.0
    %158 = vmatpush1.msra.mxu0 0.0
    %159 = vmatprep.subr.mxu0 0.0
    %160 = vmatpush1.msra.mxu0 0.0
    %161 = vmatprep.subr.mxu0 0.0
    %162 = vmatpush1.msra.mxu0 0.0
    %163 = vmatprep.subr.mxu0 0.0
    %164 = vmatpush1.msra.mxu0 0.0
    %165 = vmatprep.subr.mxu0 0.0
    %166 = vmatpush1.msra.mxu0 0.0
    %167 = vmatprep.subr.mxu0 0.0
    %168 = vmatpush1.msra.mxu0 0.0
    %169 = vmatprep.subr.mxu0 0.0
    %170 = vmatpush1.msra.mxu0 0.0
    %171 = vmatprep.subr.mxu0 0.0
    %172 = vmatpush1.msra.mxu0 0.0
    %173 = vmatprep.subr.mxu0 0.0
    %174 = vmatpush1.msra.mxu0 0.0
    %175 = vmatprep.subr.mxu0 0.0
    %176 = vmatpush1.msra.mxu0 0.0
    %177 = vmatprep.subr.mxu0 0.0
    %178 = vmatpush1.msra.mxu0 %v50
    %179 = vmatprep.subr.mxu0 0.0
    %180 = vmatpush1.msra.mxu0 %v49
    %181 = vmatprep.subr.mxu0 0.0
    %182 = vmatpush1.msra.mxu0 %v48
    %183 = vmatprep.subr.mxu0 0.0
    %184 = vmatpush1.msra.mxu0 %v47
    %185 = vmatprep.subr.mxu0 0.0
    %186 = vmatpush2.msra.mxu0 0.0
    %187 = vmatprep.subr.mxu0 0.0
    %188 = vmatpush2.msra.mxu0 0.0
    %189 = vmatprep.subr.mxu0 0.0
    %190 = vmatpush2.msra.mxu0 0.0
    %191 = vmatprep.subr.mxu0 0.0
    %192 = vmatpush2.msra.mxu0 0.0
    %193 = vmatprep.subr.mxu0 0.0
    %194 = vmatpush2.msra.mxu0 0.0
    %195 = vmatprep.subr.mxu0 0.0
    %196 = vmatpush2.msra.mxu0 0.0
    %197 = vmatprep.subr.mxu0 0.0
    %198 = vmatpush2.msra.mxu0 0.0
    %199 = vmatprep.subr.mxu0 0.0
    %200 = vmatpush2.msra.mxu0 0.0
    %201 = vmatprep.subr.mxu0 0.0
    %202 = vmatpush2.msra.mxu0 0.0
    %203 = vmatprep.subr.mxu0 0.0
    %204 = vmatpush2.msra.mxu0 0.0
    %205 = vmatprep.subr.mxu0 0.0
    %206 = vmatpush2.msra.mxu0 0.0
    %207 = vmatprep.subr.mxu0 0.0
    %208 = vmatpush2.msra.mxu0 0.0
    %209 = vmatprep.subr.mxu0 0.0
    %210 = vmatpush2.msra.mxu0 0.0
    %211 = vmatprep.subr.mxu0 0.0
    %212 = vmatpush2.msra.mxu0 0.0
    %213 = vmatprep.subr.mxu0 0.0
    %214 = vmatpush2.msra.mxu0 0.0
    %215 = vmatprep.subr.mxu0 0.0
    %216 = vmatpush2.msra.mxu0 0.0
    %217 = vmatprep.mubr.f32.mxu0 0.0
    %218 = vmatmul.mubr.f32.gmra.mxu0 %v58
    %v219 = vpop.f32.mrf.mxu0
    %v220 = vadd.f32 %v55, %v219
    %v221 = vpop.f32.mrf.mxu0
    %222 = vmatprep.mubr.f32.mxu0 0.0
    %223 = vmatmul.mubr.f32.gmra.mxu0 %v61
    %v224 = vpop.f32.mrf.mxu0
    %v225 = vadd.f32 %v55, %v224
    %v226 = vpop.f32.mrf.mxu0
    %227 = vmatprep.mubr.f32.mxu0 0.0
    %228 = vmatmul.mubr.f32.gmra.mxu0 %v64
    %v229 = vpop.f32.mrf.mxu0
    %v230 = vadd.f32 %v55, %v229
    %v231 = vpop.f32.mrf.mxu0
    %232 = vmatprep.mubr.f32.mxu0 0.0
    %233 = vmatmul.mubr.f32.gmra.mxu0 %v67
    %v234 = vpop.f32.mrf.mxu0
    %v235 = vadd.f32 %v55, %v234
    %v236 = vpop.f32.mrf.mxu0
    %237 = vmatprep.mubr.f32.mxu0 0.0
    %238 = vmatmul.mubr.f32.gmra.mxu0 %v70
    %v239 = vpop.f32.mrf.mxu0
    %v240 = vadd.f32 %v55, %v239
    %v241 = vpop.f32.mrf.mxu0
    %242 = vmatprep.mubr.f32.mxu0 0.0
    %243 = vmatmul.mubr.f32.gmra.mxu0 %v73
    %v244 = vpop.f32.mrf.mxu0
    %v245 = vadd.f32 %v55, %v244
    %v246 = vpop.f32.mrf.mxu0
    %247 = vmatprep.mubr.f32.mxu0 0.0
    %248 = vmatmul.mubr.f32.gmra.mxu0 %v76
    %v249 = vpop.f32.mrf.mxu0
    %v250 = vadd.f32 %v55, %v249
    %v251 = vpop.f32.mrf.mxu0
    %252 = vmatprep.mubr.f32.mxu0 0.0
    %253 = vmatmul.mubr.f32.gmra.mxu0 %v79
    %v254 = vpop.f32.mrf.mxu0
    %v255 = vadd.f32 %v55, %v254
    %v256 = vpop.f32.mrf.mxu0
    %257 = vmatprep.mubr.f32.mxu0 0.0
    %258 = vmatmul.mubr.f32.gmra.mxu0 %v82
    %v259 = vpop.f32.mrf.mxu0
    %v260 = vadd.f32 %v55, %v259
    %v261 = vpop.f32.mrf.mxu0
    %262 = vmatprep.mubr.f32.mxu0 0.0
    %263 = vmatmul.mubr.f32.gmra.mxu0 %v85
    %v264 = vpop.f32.mrf.mxu0
    %v265 = vadd.f32 %v55, %v264
    %v266 = vpop.f32.mrf.mxu0
    %267 = vmatprep.mubr.f32.mxu0 0.0
    %268 = vmatmul.mubr.f32.gmra.mxu0 %v88
    %v269 = vpop.f32.mrf.mxu0
    %v270 = vadd.f32 %v55, %v269
    %v271 = vpop.f32.mrf.mxu0
    %272 = vmatprep.mubr.f32.mxu0 0.0
    %273 = vmatmul.mubr.f32.gmra.mxu0 %v91
    %v274 = vpop.f32.mrf.mxu0
    %v275 = vadd.f32 %v55, %v274
    %v276 = vpop.f32.mrf.mxu0
    %277 = vmatprep.mubr.f32.mxu0 0.0
    %278 = vmatmul.mubr.f32.gmra.mxu0 %v94
    %v279 = vpop.f32.mrf.mxu0
    %v280 = vadd.f32 %v55, %v279
    %v281 = vpop.f32.mrf.mxu0
    %282 = vmatprep.mubr.f32.mxu0 0.0
    %283 = vmatmul.mubr.f32.gmra.mxu0 %v97
    %v284 = vpop.f32.mrf.mxu0
    %v285 = vadd.f32 %v55, %v284
    %v286 = vpop.f32.mrf.mxu0
    %287 = vmatprep.mubr.f32.mxu0 0.0
    %288 = vmatmul.mubr.f32.gmra.mxu0 %v100
    %v289 = vpop.f32.mrf.mxu0
    %v290 = vadd.f32 %v55, %v289
    %v291 = vpop.f32.mrf.mxu0
    %292 = vmatprep.mubr.f32.mxu0 0.0
    %293 = vmatmul.mubr.f32.gmra.mxu0 %v103
    %v294 = vpop.f32.mrf.mxu0
    %v295 = vadd.f32 %v55, %v294
    %v296 = vpop.f32.mrf.mxu0
    %297 = vmatprep.mubr.f32.mxu0 0.0
    %298 = vmatmul.mubr.f32.gmra.mxu0 %v106
    %v299 = vpop.f32.mrf.mxu0
    %v300 = vadd.f32 %v55, %v299
    %v301 = vpop.f32.mrf.mxu0
    %302 = vmatprep.mubr.f32.mxu0 0.0
    %303 = vmatmul.mubr.f32.gmra.mxu0 %v109
    %v304 = vpop.f32.mrf.mxu0
    %v305 = vadd.f32 %v55, %v304
    %v306 = vpop.f32.mrf.mxu0
    %307 = vmatprep.mubr.f32.mxu0 0.0
    %308 = vmatmul.mubr.f32.gmra.mxu0 %v112
    %v309 = vpop.f32.mrf.mxu0
    %v310 = vadd.f32 %v55, %v309
    %v311 = vpop.f32.mrf.mxu0
    %312 = vmatprep.mubr.f32.mxu0 0.0
    %313 = vmatmul.mubr.f32.gmra.mxu0 %v115
    %v314 = vpop.f32.mrf.mxu0
    %v315 = vadd.f32 %v55, %v314
    %v316 = vpop.f32.mrf.mxu0
    %317 = vmatprep.mubr.f32.mxu0 0.0
    %318 = vmatmul.mubr.f32.gmra.mxu0 %v118
    %v319 = vpop.f32.mrf.mxu0
    %v320 = vadd.f32 %v55, %v319
    %v321 = vpop.f32.mrf.mxu0
    %322 = vmatprep.mubr.f32.mxu0 0.0
    %323 = vmatmul.mubr.f32.gmra.mxu0 %v121
    %v324 = vpop.f32.mrf.mxu0
    %v325 = vadd.f32 %v55, %v324
    %v326 = vpop.f32.mrf.mxu0
    %327 = vmatprep.mubr.f32.mxu0 0.0
    %328 = vmatmul.mubr.f32.gmra.mxu0 %v124
    %v329 = vpop.f32.mrf.mxu0
    %v330 = vadd.f32 %v55, %v329
    %v331 = vpop.f32.mrf.mxu0
    %332 = vmatprep.mubr.f32.mxu0 0.0
    %333 = vmatmul.mubr.f32.gmra.mxu0 %v127
    %v334 = vpop.f32.mrf.mxu0
    %v335 = vadd.f32 %v55, %v334
    %v336 = vpop.f32.mrf.mxu0
    %337 = vmatprep.mubr.f32.mxu0 0.0
    %338 = vmatmul.mubr.f32.gmra.mxu0 %v130
    %v339 = vpop.f32.mrf.mxu0
    %v340 = vadd.f32 %v55, %v339
    %v341 = vpop.f32.mrf.mxu0
    %342 = vmatprep.mubr.f32.mxu0 0.0
    %343 = vmatmul.mubr.f32.gmra.mxu0 %v133
    %v344 = vpop.f32.mrf.mxu0
    %v345 = vadd.f32 %v55, %v344
    %v346 = vpop.f32.mrf.mxu0
    %347 = vmatprep.mubr.f32.mxu0 0.0
    %348 = vmatmul.mubr.f32.gmra.mxu0 %v136
    %v349 = vpop.f32.mrf.mxu0
    %v350 = vadd.f32 %v55, %v349
    %v351 = vpop.f32.mrf.mxu0
    %352 = vmatprep.mubr.f32.mxu0 0.0
    %353 = vmatmul.mubr.f32.gmra.mxu0 %v139
    %v354 = vpop.f32.mrf.mxu0
    %v355 = vadd.f32 %v55, %v354
    %v356 = vpop.f32.mrf.mxu0
    %357 = vmatprep.mubr.f32.mxu0 0.0
    %358 = vmatmul.mubr.f32.gmra.mxu0 %v142
    %v359 = vpop.f32.mrf.mxu0
    %v360 = vadd.f32 %v55, %v359
    %v361 = vpop.f32.mrf.mxu0
    %362 = vmatprep.mubr.f32.mxu0 0.0
    %363 = vmatmul.mubr.f32.gmra.mxu0 %v145
    %v364 = vpop.f32.mrf.mxu0
    %v365 = vadd.f32 %v55, %v364
    %v366 = vpop.f32.mrf.mxu0
    %367 = vmatprep.mubr.f32.mxu0 0.0
    %368 = vmatmul.mubr.f32.gmra.mxu0 %v148
    %v369 = vpop.f32.mrf.mxu0
    %v370 = vadd.f32 %v55, %v369
    %v371 = vpop.f32.mrf.mxu0
    %372 = vmatprep.mubr.f32.mxu0 0.0
    %373 = vmatmul.mubr.f32.gmra.mxu0 %v151
    %v374 = vpop.f32.mrf.mxu0
    %v375 = vadd.f32 %v55, %v374
    %v376 = vpop.f32.mrf.mxu0
    %377 = vdwg.mxu0
    %v378 = vmax.f32 %v220, 0.0
    %v379 = vmax.f32 %v225, 0.0
    %v380 = vmax.f32 %v230, 0.0
    %v381 = vmax.f32 %v235, 0.0
    %v382 = vmax.f32 %v240, 0.0
    %v383 = vmax.f32 %v245, 0.0
    %v384 = vmax.f32 %v250, 0.0
    %v385 = vmax.f32 %v255, 0.0
    %v386 = vmax.f32 %v260, 0.0
    %v387 = vmax.f32 %v265, 0.0
    %v388 = vmax.f32 %v270, 0.0
    %v389 = vmax.f32 %v275, 0.0
    %v390 = vmax.f32 %v280, 0.0
    %v391 = vmax.f32 %v285, 0.0
    %v392 = vmax.f32 %v290, 0.0
    %v393 = vmax.f32 %v295, 0.0
    %v394 = vmax.f32 %v300, 0.0
    %v395 = vmax.f32 %v305, 0.0
    %v396 = vmax.f32 %v310, 0.0
    %v397 = vmax.f32 %v315, 0.0
    %v398 = vmax.f32 %v320, 0.0
    %v399 = vmax.f32 %v325, 0.0
    %v400 = vmax.f32 %v330, 0.0
    %v401 = vmax.f32 %v335, 0.0
    %v402 = vmax.f32 %v340, 0.0
    %v403 = vmax.f32 %v345, 0.0
    %v404 = vmax.f32 %v350, 0.0
    %v405 = vmax.f32 %v355, 0.0
    %v406 = vmax.f32 %v360, 0.0
    %v407 = vmax.f32 %v365, 0.0
    %v408 = vmax.f32 %v370, 0.0
    %v409 = vmax.f32 %v375, 0.0
    %v410 = vld [vmem:[%s1 + $0x20] sm:$0xff]
    %v411 = vld [vmem:[%s1 + $0x28] sm:$0xff]
    %v412 = vld [vmem:[%s1 + $0x30] sm:$0xff]
    %v413 = vld [vmem:[%s1 + $0x38] sm:$0xff]
    %v414 = vld [vmem:[%s1 + $0x40] sm:$0xff]
    %v415 = vld [vmem:[%s1 + $0x48] sm:$0xff]
    %v416 = vld [vmem:[%s1 + $0x50] sm:$0xff]
    %v417 = vld [vmem:[%s1 + $0x58] sm:$0xff]
    %v418 = vld [vmem:[%s1 + $0x60] sm:$0xff]
    %v419 = vld [vmem:[%s1 + $0x68] sm:$0xff]
    %v420 = vld [vmem:[%s1 + $0x70] sm:$0xff]
    %v421 = vld [vmem:[%s1 + $0x78] sm:$0xff]
    %v422 = vld [vmem:[%s1 + $0x80] sm:$0xff]
    %v423 = vld [vmem:[%s1 + $0x88] sm:$0xff]
    %v424 = vld [vmem:[%s1 + $0x90] sm:$0xff]
    %v425 = vld [vmem:[%s1 + $0x98] sm:$0xff]
    %v426 = vld [vmem:[%s2 + $0x1] sm:$0x1]
    %v427 = vlaneseq
    %v428 = vshrl.u32 %v427, 7
    %v429 = vsub.s32 0, %v428
    %v430 = vrot.slane %v426, %v429
    %431 = vmatprep.subr.mxu0 0.0
    %432 = vmatpush1.msra.mxu0 %v425
    %433 = vmatprep.subr.mxu0 0.0
    %434 = vmatpush1.msra.mxu0 %v424
    %435 = vmatprep.subr.mxu0 0.0
    %436 = vmatpush1.msra.mxu0 %v423
    %437 = vmatprep.subr.mxu0 0.0
    %438 = vmatpush1.msra.mxu0 %v422
    %439 = vmatprep.subr.mxu0 0.0
    %440 = vmatpush1.msra.mxu0 %v421
    %441 = vmatprep.subr.mxu0 0.0
    %442 = vmatpush1.msra.mxu0 %v420
    %443 = vmatprep.subr.mxu0 0.0
    %444 = vmatpush1.msra.mxu0 %v419
    %445 = vmatprep.subr.mxu0 0.0
    %446 = vmatpush1.msra.mxu0 %v418
    %447 = vmatprep.subr.mxu0 0.0
    %448 = vmatpush1.msra.mxu0 %v417
    %449 = vmatprep.subr.mxu0 0.0
    %450 = vmatpush1.msra.mxu0 %v416
    %451 = vmatprep.subr.mxu0 0.0
    %452 = vmatpush1.msra.mxu0 %v415
    %453 = vmatprep.subr.mxu0 0.0
    %454 = vmatpush1.msra.mxu0 %v414
    %455 = vmatprep.subr.mxu0 0.0
    %456 = vmatpush1.msra.mxu0 %v413
    %457 = vmatprep.subr.mxu0 0.0
    %458 = vmatpush1.msra.mxu0 %v412
    %459 = vmatprep.subr.mxu0 0.0
    %460 = vmatpush1.msra.mxu0 %v411
    %461 = vmatprep.subr.mxu0 0.0
    %462 = vmatpush1.msra.mxu0 %v410
    %463 = vmatprep.subr.mxu0 0.0
    %464 = vmatpush2.msra.mxu0 0.0
    %465 = vmatprep.subr.mxu0 0.0
    %466 = vmatpush2.msra.mxu0 0.0
    %467 = vmatprep.subr.mxu0 0.0
    %468 = vmatpush2.msra.mxu0 0.0
    %469 = vmatprep.subr.mxu0 0.0
    %470 = vmatpush2.msra.mxu0 0.0
    %471 = vmatprep.subr.mxu0 0.0
    %472 = vmatpush2.msra.mxu0 0.0
    %473 = vmatprep.subr.mxu0 0.0
    %474 = vmatpush2.msra.mxu0 0.0
    %475 = vmatprep.subr.mxu0 0.0
    %476 = vmatpush2.msra.mxu0 0.0
    %477 = vmatprep.subr.mxu0 0.0
    %478 = vmatpush2.msra.mxu0 0.0
    %479 = vmatprep.subr.mxu0 0.0
    %480 = vmatpush2.msra.mxu0 0.0
    %481 = vmatprep.subr.mxu0 0.0
    %482 = vmatpush2.msra.mxu0 0.0
    %483 = vmatprep.subr.mxu0 0.0
    %484 = vmatpush2.msra.mxu0 0.0
    %485 = vmatprep.subr.mxu0 0.0
    %486 = vmatpush2.msra.mxu0 0.0
    %487 = vmatprep.subr.mxu0 0.0
    %488 = vmatpush2.msra.mxu0 0.0
    %489 = vmatprep.subr.mxu0 0.0
    %490 = vmatpush2.msra.mxu0 0.0
    %491 = vmatprep.subr.mxu0 0.0
    %492 = vmatpush2.msra.mxu0 0.0
    %493 = vmatprep.subr.mxu0 0.0
    %494 = vmatpush2.msra.mxu0 0.0
    %495 = vmatprep.mubr.f32.mxu0 0.0
    %496 = vmatmul.mubr.f32.gmra.mxu0 %v378
    %v497 = vpop.f32.mrf.mxu0
    %v498 = vadd.f32 %v430, %v497
    %v499 = vpop.f32.mrf.mxu0
    %500 = vmatprep.mubr.f32.mxu0 0.0
    %501 = vmatmul.mubr.f32.gmra.mxu0 %v379
    %v502 = vpop.f32.mrf.mxu0
    %v503 = vadd.f32 %v430, %v502
    %v504 = vpop.f32.mrf.mxu0
    %505 = vmatprep.mubr.f32.mxu0 0.0
    %506 = vmatmul.mubr.f32.gmra.mxu0 %v380
    %v507 = vpop.f32.mrf.mxu0
    %v508 = vadd.f32 %v430, %v507
    %v509 = vpop.f32.mrf.mxu0
    %510 = vmatprep.mubr.f32.mxu0 0.0
    %511 = vmatmul.mubr.f32.gmra.mxu0 %v381
    %v512 = vpop.f32.mrf.mxu0
    %v513 = vadd.f32 %v430, %v512
    %v514 = vpop.f32.mrf.mxu0
    %515 = vmatprep.mubr.f32.mxu0 0.0
    %516 = vmatmul.mubr.f32.gmra.mxu0 %v382
    %v517 = vpop.f32.mrf.mxu0
    %v518 = vadd.f32 %v430, %v517
    %v519 = vpop.f32.mrf.mxu0
    %520 = vmatprep.mubr.f32.mxu0 0.0
    %521 = vmatmul.mubr.f32.gmra.mxu0 %v383
    %v522 = vpop.f32.mrf.mxu0
    %v523 = vadd.f32 %v430, %v522
    %v524 = vpop.f32.mrf.mxu0
    %525 = vmatprep.mubr.f32.mxu0 0.0
    %526 = vmatmul.mubr.f32.gmra.mxu0 %v384
    %v527 = vpop.f32.mrf.mxu0
    %v528 = vadd.f32 %v430, %v527
    %v529 = vpop.f32.mrf.mxu0
    %530 = vmatprep.mubr.f32.mxu0 0.0
    %531 = vmatmul.mubr.f32.gmra.mxu0 %v385
    %v532 = vpop.f32.mrf.mxu0
    %v533 = vadd.f32 %v430, %v532
    %v534 = vpop.f32.mrf.mxu0
    %535 = vmatprep.mubr.f32.mxu0 0.0
    %536 = vmatmul.mubr.f32.gmra.mxu0 %v386
    %v537 = vpop.f32.mrf.mxu0
    %v538 = vadd.f32 %v430, %v537
    %v539 = vpop.f32.mrf.mxu0
    %540 = vmatprep.mubr.f32.mxu0 0.0
    %541 = vmatmul.mubr.f32.gmra.mxu0 %v387
    %v542 = vpop.f32.mrf.mxu0
    %v543 = vadd.f32 %v430, %v542
    %v544 = vpop.f32.mrf.mxu0
    %545 = vmatprep.mubr.f32.mxu0 0.0
    %546 = vmatmul.mubr.f32.gmra.mxu0 %v388
    %v547 = vpop.f32.mrf.mxu0
    %v548 = vadd.f32 %v430, %v547
    %v549 = vpop.f32.mrf.mxu0
    %550 = vmatprep.mubr.f32.mxu0 0.0
    %551 = vmatmul.mubr.f32.gmra.mxu0 %v389
    %v552 = vpop.f32.mrf.mxu0
    %v553 = vadd.f32 %v430, %v552
    %v554 = vpop.f32.mrf.mxu0
    %555 = vmatprep.mubr.f32.mxu0 0.0
    %556 = vmatmul.mubr.f32.gmra.mxu0 %v390
    %v557 = vpop.f32.mrf.mxu0
    %v558 = vadd.f32 %v430, %v557
    %v559 = vpop.f32.mrf.mxu0
    %560 = vmatprep.mubr.f32.mxu0 0.0
    %561 = vmatmul.mubr.f32.gmra.mxu0 %v391
    %v562 = vpop.f32.mrf.mxu0
    %v563 = vadd.f32 %v430, %v562
    %v564 = vpop.f32.mrf.mxu0
    %565 = vmatprep.mubr.f32.mxu0 0.0
    %566 = vmatmul.mubr.f32.gmra.mxu0 %v392
    %v567 = vpop.f32.mrf.mxu0
    %v568 = vadd.f32 %v430, %v567
    %v569 = vpop.f32.mrf.mxu0
    %570 = vmatprep.mubr.f32.mxu0 0.0
    %571 = vmatmul.mubr.f32.gmra.mxu0 %v393
    %v572 = vpop.f32.mrf.mxu0
    %v573 = vadd.f32 %v430, %v572
    %v574 = vpop.f32.mrf.mxu0
    %575 = vmatprep.mubr.f32.mxu0 0.0
    %576 = vmatmul.mubr.f32.gmra.mxu0 %v394
    %v577 = vpop.f32.mrf.mxu0
    %v578 = vadd.f32 %v430, %v577
    %v579 = vpop.f32.mrf.mxu0
    %580 = vmatprep.mubr.f32.mxu0 0.0
    %581 = vmatmul.mubr.f32.gmra.mxu0 %v395
    %v582 = vpop.f32.mrf.mxu0
    %v583 = vadd.f32 %v430, %v582
    %v584 = vpop.f32.mrf.mxu0
    %585 = vmatprep.mubr.f32.mxu0 0.0
    %586 = vmatmul.mubr.f32.gmra.mxu0 %v396
    %v587 = vpop.f32.mrf.mxu0
    %v588 = vadd.f32 %v430, %v587
    %v589 = vpop.f32.mrf.mxu0
    %590 = vmatprep.mubr.f32.mxu0 0.0
    %591 = vmatmul.mubr.f32.gmra.mxu0 %v397
    %v592 = vpop.f32.mrf.mxu0
    %v593 = vadd.f32 %v430, %v592
    %v594 = vpop.f32.mrf.mxu0
    %595 = vmatprep.mubr.f32.mxu0 0.0
    %596 = vmatmul.mubr.f32.gmra.mxu0 %v398
    %v597 = vpop.f32.mrf.mxu0
    %v598 = vadd.f32 %v430, %v597
    %v599 = vpop.f32.mrf.mxu0
    %600 = vmatprep.mubr.f32.mxu0 0.0
    %601 = vmatmul.mubr.f32.gmra.mxu0 %v399
    %v602 = vpop.f32.mrf.mxu0
    %v603 = vadd.f32 %v430, %v602
    %v604 = vpop.f32.mrf.mxu0
    %605 = vmatprep.mubr.f32.mxu0 0.0
    %606 = vmatmul.mubr.f32.gmra.mxu0 %v400
    %v607 = vpop.f32.mrf.mxu0
    %v608 = vadd.f32 %v430, %v607
    %v609 = vpop.f32.mrf.mxu0
    %610 = vmatprep.mubr.f32.mxu0 0.0
    %611 = vmatmul.mubr.f32.gmra.mxu0 %v401
    %v612 = vpop.f32.mrf.mxu0
    %v613 = vadd.f32 %v430, %v612
    %v614 = vpop.f32.mrf.mxu0
    %615 = vmatprep.mubr.f32.mxu0 0.0
    %616 = vmatmul.mubr.f32.gmra.mxu0 %v402
    %v617 = vpop.f32.mrf.mxu0
    %v618 = vadd.f32 %v430, %v617
    %v619 = vpop.f32.mrf.mxu0
    %620 = vmatprep.mubr.f32.mxu0 0.0
    %621 = vmatmul.mubr.f32.gmra.mxu0 %v403
    %v622 = vpop.f32.mrf.mxu0
    %v623 = vadd.f32 %v430, %v622
    %v624 = vpop.f32.mrf.mxu0
    %625 = vmatprep.mubr.f32.mxu0 0.0
    %626 = vmatmul.mubr.f32.gmra.mxu0 %v404
    %v627 = vpop.f32.mrf.mxu0
    %v628 = vadd.f32 %v430, %v627
    %v629 = vpop.f32.mrf.mxu0
    %630 = vmatprep.mubr.f32.mxu0 0.0
    %631 = vmatmul.mubr.f32.gmra.mxu0 %v405
    %v632 = vpop.f32.mrf.mxu0
    %v633 = vadd.f32 %v430, %v632
    %v634 = vpop.f32.mrf.mxu0
    %635 = vmatprep.mubr.f32.mxu0 0.0
    %636 = vmatmul.mubr.f32.gmra.mxu0 %v406
    %v637 = vpop.f32.mrf.mxu0
    %v638 = vadd.f32 %v430, %v637
    %v639 = vpop.f32.mrf.mxu0
    %640 = vmatprep.mubr.f32.mxu0 0.0
    %641 = vmatmul.mubr.f32.gmra.mxu0 %v407
    %v642 = vpop.f32.mrf.mxu0
    %v643 = vadd.f32 %v430, %v642
    %v644 = vpop.f32.mrf.mxu0
    %645 = vmatprep.mubr.f32.mxu0 0.0
    %646 = vmatmul.mubr.f32.gmra.mxu0 %v408
    %v647 = vpop.f32.mrf.mxu0
    %v648 = vadd.f32 %v430, %v647
    %v649 = vpop.f32.mrf.mxu0
    %650 = vmatprep.mubr.f32.mxu0 0.0
    %651 = vmatmul.mubr.f32.gmra.mxu0 %v409
    %v652 = vpop.f32.mrf.mxu0
    %v653 = vadd.f32 %v430, %v652
    %v654 = vpop.f32.mrf.mxu0
    %655 = vdwg.mxu0
    %v656 = vmax.f32 %v498, 0.0
    %v657 = vmax.f32 %v503, 0.0
    %v658 = vmax.f32 %v508, 0.0
    %v659 = vmax.f32 %v513, 0.0
    %v660 = vmax.f32 %v518, 0.0
    %v661 = vmax.f32 %v523, 0.0
    %v662 = vmax.f32 %v528, 0.0
    %v663 = vmax.f32 %v533, 0.0
    %v664 = vmax.f32 %v538, 0.0
    %v665 = vmax.f32 %v543, 0.0
    %v666 = vmax.f32 %v548, 0.0
    %v667 = vmax.f32 %v553, 0.0
    %v668 = vmax.f32 %v558, 0.0
    %v669 = vmax.f32 %v563, 0.0
    %v670 = vmax.f32 %v568, 0.0
    %v671 = vmax.f32 %v573, 0.0
    %v672 = vmax.f32 %v578, 0.0
    %v673 = vmax.f32 %v583, 0.0
    %v674 = vmax.f32 %v588, 0.0
    %v675 = vmax.f32 %v593, 0.0
    %v676 = vmax.f32 %v598, 0.0
    %v677 = vmax.f32 %v603, 0.0
    %v678 = vmax.f32 %v608, 0.0
    %v679 = vmax.f32 %v613, 0.0
    %v680 = vmax.f32 %v618, 0.0
    %v681 = vmax.f32 %v623, 0.0
    %v682 = vmax.f32 %v628, 0.0
    %v683 = vmax.f32 %v633, 0.0
    %v684 = vmax.f32 %v638, 0.0
    %v685 = vmax.f32 %v643, 0.0
    %v686 = vmax.f32 %v648, 0.0
    %v687 = vmax.f32 %v653, 0.0
    %v688 = vld [vmem:[%s1 + $0xa0] sm:$0xff]
    %v689 = vld [vmem:[%s1 + $0xa8] sm:$0xff]
    %v690 = vld [vmem:[%s1 + $0xb0] sm:$0xff]
    %v691 = vld [vmem:[%s1 + $0xb8] sm:$0xff]
    %v692 = vld [vmem:[%s1 + $0xc0] sm:$0xff]
    %v693 = vld [vmem:[%s1 + $0xc8] sm:$0xff]
    %v694 = vld [vmem:[%s1 + $0xd0] sm:$0xff]
    %v695 = vld [vmem:[%s1 + $0xd8] sm:$0xff]
    %v696 = vld [vmem:[%s1 + $0xe0] sm:$0xff]
    %v697 = vld [vmem:[%s1 + $0xe8] sm:$0xff]
    %v698 = vld [vmem:[%s1 + $0xf0] sm:$0xff]
    %v699 = vld [vmem:[%s1 + $0xf8] sm:$0xff]
    %v700 = vld [vmem:[%s1 + $0x100] sm:$0xff]
    %v701 = vld [vmem:[%s1 + $0x108] sm:$0xff]
    %v702 = vld [vmem:[%s1 + $0x110] sm:$0xff]
    %v703 = vld [vmem:[%s1 + $0x118] sm:$0xff]
    %v704 = vld [vmem:[%s2 + $0x2] sm:$0x1]
    %v705 = vlaneseq
    %v706 = vshrl.u32 %v705, 7
    %v707 = vsub.s32 0, %v706
    %v708 = vrot.slane %v704, %v707
    %709 = vmatprep.subr.mxu0 0.0
    %710 = vmatpush1.msra.mxu0 %v703
    %711 = vmatprep.subr.mxu0 0.0
    %712 = vmatpush1.msra.mxu0 %v702
    %713 = vmatprep.subr.mxu0 0.0
    %714 = vmatpush1.msra.mxu0 %v701
    %715 = vmatprep.subr.mxu0 0.0
    %716 = vmatpush1.msra.mxu0 %v700
    %717 = vmatprep.subr.mxu0 0.0
    %718 = vmatpush1.msra.mxu0 %v699
    %719 = vmatprep.subr.mxu0 0.0
    %720 = vmatpush1.msra.mxu0 %v698
    %721 = vmatprep.subr.mxu0 0.0
    %722 = vmatpush1.msra.mxu0 %v697
    %723 = vmatprep.subr.mxu0 0.0
    %724 = vmatpush1.msra.mxu0 %v696
    %725 = vmatprep.subr.mxu0 0.0
    %726 = vmatpush1.msra.mxu0 %v695
    %727 = vmatprep.subr.mxu0 0.0
    %728 = vmatpush1.msra.mxu0 %v694
    %729 = vmatprep.subr.mxu0 0.0
    %730 = vmatpush1.msra.mxu0 %v693
    %731 = vmatprep.subr.mxu0 0.0
    %732 = vmatpush1.msra.mxu0 %v692
    %733 = vmatprep.subr.mxu0 0.0
    %734 = vmatpush1.msra.mxu0 %v691
    %735 = vmatprep.subr.mxu0 0.0
    %736 = vmatpush1.msra.mxu0 %v690
    %737 = vmatprep.subr.mxu0 0.0
    %738 = vmatpush1.msra.mxu0 %v689
    %739 = vmatprep.subr.mxu0 0.0
    %740 = vmatpush1.msra.mxu0 %v688
    %741 = vmatprep.subr.mxu0 0.0
    %742 = vmatpush2.msra.mxu0 0.0
    %743 = vmatprep.subr.mxu0 0.0
    %744 = vmatpush2.msra.mxu0 0.0
    %745 = vmatprep.subr.mxu0 0.0
    %746 = vmatpush2.msra.mxu0 0.0
    %747 = vmatprep.subr.mxu0 0.0
    %748 = vmatpush2.msra.mxu0 0.0
    %749 = vmatprep.subr.mxu0 0.0
    %750 = vmatpush2.msra.mxu0 0.0
    %751 = vmatprep.subr.mxu0 0.0
    %752 = vmatpush2.msra.mxu0 0.0
    %753 = vmatprep.subr.mxu0 0.0
    %754 = vmatpush2.msra.mxu0 0.0
    %755 = vmatprep.subr.mxu0 0.0
    %756 = vmatpush2.msra.mxu0 0.0
    %757 = vmatprep.subr.mxu0 0.0
    %758 = vmatpush2.msra.mxu0 0.0
    %759 = vmatprep.subr.mxu0 0.0
    %760 = vmatpush2.msra.mxu0 0.0
    %761 = vmatprep.subr.mxu0 0.0
    %762 = vmatpush2.msra.mxu0 0.0
    %763 = vmatprep.subr.mxu0 0.0
    %764 = vmatpush2.msra.mxu0 0.0
    %765 = vmatprep.subr.mxu0 0.0
    %766 = vmatpush2.msra.mxu0 0.0
    %767 = vmatprep.subr.mxu0 0.0
    %768 = vmatpush2.msra.mxu0 0.0
    %769 = vmatprep.subr.mxu0 0.0
    %770 = vmatpush2.msra.mxu0 0.0
    %771 = vmatprep.subr.mxu0 0.0
    %772 = vmatpush2.msra.mxu0 0.0
    %773 = vmatprep.mubr.f32.mxu0 0.0
    %774 = vmatmul.mubr.f32.gmra.mxu0 %v656
    %v775 = vpop.f32.mrf.mxu0
    %v776 = vadd.f32 %v708, %v775
    %v777 = vpop.f32.mrf.mxu0
    %778 = vmatprep.mubr.f32.mxu0 0.0
    %779 = vmatmul.mubr.f32.gmra.mxu0 %v657
    %v780 = vpop.f32.mrf.mxu0
    %v781 = vadd.f32 %v708, %v780
    %v782 = vpop.f32.mrf.mxu0
    %783 = vmatprep.mubr.f32.mxu0 0.0
    %784 = vmatmul.mubr.f32.gmra.mxu0 %v658
    %v785 = vpop.f32.mrf.mxu0
    %v786 = vadd.f32 %v708, %v785
    %v787 = vpop.f32.mrf.mxu0
    %788 = vmatprep.mubr.f32.mxu0 0.0
    %789 = vmatmul.mubr.f32.gmra.mxu0 %v659
    %v790 = vpop.f32.mrf.mxu0
    %v791 = vadd.f32 %v708, %v790
    %v792 = vpop.f32.mrf.mxu0
    %793 = vmatprep.mubr.f32.mxu0 0.0
    %794 = vmatmul.mubr.f32.gmra.mxu0 %v660
    %v795 = vpop.f32.mrf.mxu0
    %v796 = vadd.f32 %v708, %v795
    %v797 = vpop.f32.mrf.mxu0
    %798 = vmatprep.mubr.f32.mxu0 0.0
    %799 = vmatmul.mubr.f32.gmra.mxu0 %v661
    %v800 = vpop.f32.mrf.mxu0
    %v801 = vadd.f32 %v708, %v800
    %v802 = vpop.f32.mrf.mxu0
    %803 = vmatprep.mubr.f32.mxu0 0.0
    %804 = vmatmul.mubr.f32.gmra.mxu0 %v662
    %v805 = vpop.f32.mrf.mxu0
    %v806 = vadd.f32 %v708, %v805
    %v807 = vpop.f32.mrf.mxu0
    %808 = vmatprep.mubr.f32.mxu0 0.0
    %809 = vmatmul.mubr.f32.gmra.mxu0 %v663
    %v810 = vpop.f32.mrf.mxu0
    %v811 = vadd.f32 %v708, %v810
    %v812 = vpop.f32.mrf.mxu0
    %813 = vmatprep.mubr.f32.mxu0 0.0
    %814 = vmatmul.mubr.f32.gmra.mxu0 %v664
    %v815 = vpop.f32.mrf.mxu0
    %v816 = vadd.f32 %v708, %v815
    %v817 = vpop.f32.mrf.mxu0
    %818 = vmatprep.mubr.f32.mxu0 0.0
    %819 = vmatmul.mubr.f32.gmra.mxu0 %v665
    %v820 = vpop.f32.mrf.mxu0
    %v821 = vadd.f32 %v708, %v820
    %v822 = vpop.f32.mrf.mxu0
    %823 = vmatprep.mubr.f32.mxu0 0.0
    %824 = vmatmul.mubr.f32.gmra.mxu0 %v666
    %v825 = vpop.f32.mrf.mxu0
    %v826 = vadd.f32 %v708, %v825
    %v827 = vpop.f32.mrf.mxu0
    %828 = vmatprep.mubr.f32.mxu0 0.0
    %829 = vmatmul.mubr.f32.gmra.mxu0 %v667
    %v830 = vpop.f32.mrf.mxu0
    %v831 = vadd.f32 %v708, %v830
    %v832 = vpop.f32.mrf.mxu0
    %833 = vmatprep.mubr.f32.mxu0 0.0
    %834 = vmatmul.mubr.f32.gmra.mxu0 %v668
    %v835 = vpop.f32.mrf.mxu0
    %v836 = vadd.f32 %v708, %v835
    %v837 = vpop.f32.mrf.mxu0
    %838 = vmatprep.mubr.f32.mxu0 0.0
    %839 = vmatmul.mubr.f32.gmra.mxu0 %v669
    %v840 = vpop.f32.mrf.mxu0
    %v841 = vadd.f32 %v708, %v840
    %v842 = vpop.f32.mrf.mxu0
    %843 = vmatprep.mubr.f32.mxu0 0.0
    %844 = vmatmul.mubr.f32.gmra.mxu0 %v670
    %v845 = vpop.f32.mrf.mxu0
    %v846 = vadd.f32 %v708, %v845
    %v847 = vpop.f32.mrf.mxu0
    %848 = vmatprep.mubr.f32.mxu0 0.0
    %849 = vmatmul.mubr.f32.gmra.mxu0 %v671
    %v850 = vpop.f32.mrf.mxu0
    %v851 = vadd.f32 %v708, %v850
    %v852 = vpop.f32.mrf.mxu0
    %853 = vmatprep.mubr.f32.mxu0 0.0
    %854 = vmatmul.mubr.f32.gmra.mxu0 %v672
    %v855 = vpop.f32.mrf.mxu0
    %v856 = vadd.f32 %v708, %v855
    %v857 = vpop.f32.mrf.mxu0
    %858 = vmatprep.mubr.f32.mxu0 0.0
    %859 = vmatmul.mubr.f32.gmra.mxu0 %v673
    %v860 = vpop.f32.mrf.mxu0
    %v861 = vadd.f32 %v708, %v860
    %v862 = vpop.f32.mrf.mxu0
    %863 = vmatprep.mubr.f32.mxu0 0.0
    %864 = vmatmul.mubr.f32.gmra.mxu0 %v674
    %v865 = vpop.f32.mrf.mxu0
    %v866 = vadd.f32 %v708, %v865
    %v867 = vpop.f32.mrf.mxu0
    %868 = vmatprep.mubr.f32.mxu0 0.0
    %869 = vmatmul.mubr.f32.gmra.mxu0 %v675
    %v870 = vpop.f32.mrf.mxu0
    %v871 = vadd.f32 %v708, %v870
    %v872 = vpop.f32.mrf.mxu0
    %873 = vmatprep.mubr.f32.mxu0 0.0
    %874 = vmatmul.mubr.f32.gmra.mxu0 %v676
    %v875 = vpop.f32.mrf.mxu0
    %v876 = vadd.f32 %v708, %v875
    %v877 = vpop.f32.mrf.mxu0
    %878 = vmatprep.mubr.f32.mxu0 0.0
    %879 = vmatmul.mubr.f32.gmra.mxu0 %v677
    %v880 = vpop.f32.mrf.mxu0
    %v881 = vadd.f32 %v708, %v880
    %v882 = vpop.f32.mrf.mxu0
    %883 = vmatprep.mubr.f32.mxu0 0.0
    %884 = vmatmul.mubr.f32.gmra.mxu0 %v678
    %v885 = vpop.f32.mrf.mxu0
    %v886 = vadd.f32 %v708, %v885
    %v887 = vpop.f32.mrf.mxu0
    %888 = vmatprep.mubr.f32.mxu0 0.0
    %889 = vmatmul.mubr.f32.gmra.mxu0 %v679
    %v890 = vpop.f32.mrf.mxu0
    %v891 = vadd.f32 %v708, %v890
    %v892 = vpop.f32.mrf.mxu0
    %893 = vmatprep.mubr.f32.mxu0 0.0
    %894 = vmatmul.mubr.f32.gmra.mxu0 %v680
    %v895 = vpop.f32.mrf.mxu0
    %v896 = vadd.f32 %v708, %v895
    %v897 = vpop.f32.mrf.mxu0
    %898 = vmatprep.mubr.f32.mxu0 0.0
    %899 = vmatmul.mubr.f32.gmra.mxu0 %v681
    %v900 = vpop.f32.mrf.mxu0
    %v901 = vadd.f32 %v708, %v900
    %v902 = vpop.f32.mrf.mxu0
    %903 = vmatprep.mubr.f32.mxu0 0.0
    %904 = vmatmul.mubr.f32.gmra.mxu0 %v682
    %v905 = vpop.f32.mrf.mxu0
    %v906 = vadd.f32 %v708, %v905
    %v907 = vpop.f32.mrf.mxu0
    %908 = vmatprep.mubr.f32.mxu0 0.0
    %909 = vmatmul.mubr.f32.gmra.mxu0 %v683
    %v910 = vpop.f32.mrf.mxu0
    %v911 = vadd.f32 %v708, %v910
    %v912 = vpop.f32.mrf.mxu0
    %913 = vmatprep.mubr.f32.mxu0 0.0
    %914 = vmatmul.mubr.f32.gmra.mxu0 %v684
    %v915 = vpop.f32.mrf.mxu0
    %v916 = vadd.f32 %v708, %v915
    %v917 = vpop.f32.mrf.mxu0
    %918 = vmatprep.mubr.f32.mxu0 0.0
    %919 = vmatmul.mubr.f32.gmra.mxu0 %v685
    %v920 = vpop.f32.mrf.mxu0
    %v921 = vadd.f32 %v708, %v920
    %v922 = vpop.f32.mrf.mxu0
    %923 = vmatprep.mubr.f32.mxu0 0.0
    %924 = vmatmul.mubr.f32.gmra.mxu0 %v686
    %v925 = vpop.f32.mrf.mxu0
    %v926 = vadd.f32 %v708, %v925
    %v927 = vpop.f32.mrf.mxu0
    %928 = vmatprep.mubr.f32.mxu0 0.0
    %929 = vmatmul.mubr.f32.gmra.mxu0 %v687
    %v930 = vpop.f32.mrf.mxu0
    %v931 = vadd.f32 %v708, %v930
    %v932 = vpop.f32.mrf.mxu0
    %933 = vdwg.mxu0
    %v934 = vmax.f32 %v776, 0.0
    %v935 = vmax.f32 %v781, 0.0
    %v936 = vmax.f32 %v786, 0.0
    %v937 = vmax.f32 %v791, 0.0
    %v938 = vmax.f32 %v796, 0.0
    %v939 = vmax.f32 %v801, 0.0
    %v940 = vmax.f32 %v806, 0.0
    %v941 = vmax.f32 %v811, 0.0
    %v942 = vmax.f32 %v816, 0.0
    %v943 = vmax.f32 %v821, 0.0
    %v944 = vmax.f32 %v826, 0.0
    %v945 = vmax.f32 %v831, 0.0
    %v946 = vmax.f32 %v836, 0.0
    %v947 = vmax.f32 %v841, 0.0
    %v948 = vmax.f32 %v846, 0.0
    %v949 = vmax.f32 %v851, 0.0
    %v950 = vmax.f32 %v856, 0.0
    %v951 = vmax.f32 %v861, 0.0
    %v952 = vmax.f32 %v866, 0.0
    %v953 = vmax.f32 %v871, 0.0
    %v954 = vmax.f32 %v876, 0.0
    %v955 = vmax.f32 %v881, 0.0
    %v956 = vmax.f32 %v886, 0.0
    %v957 = vmax.f32 %v891, 0.0
    %v958 = vmax.f32 %v896, 0.0
    %v959 = vmax.f32 %v901, 0.0
    %v960 = vmax.f32 %v906, 0.0
    %v961 = vmax.f32 %v911, 0.0
    %v962 = vmax.f32 %v916, 0.0
    %v963 = vmax.f32 %v921, 0.0
    %v964 = vmax.f32 %v926, 0.0
    %v965 = vmax.f32 %v931, 0.0
    %v966 = vld [vmem:[%s2 + $0x3] sm:$0x1]
    %v967 = vld [vmem:[%s2 + $0x4] sm:$0x1]
    %969 = vset.pattern.permute.xlu0 0
    %970 = vperm.xlu0 %969, %v967
    %v971 = vpop.permute.xlu0 %970
    %973 = vmatprep.subr.mxu0 0.0
    %974 = vmatpush1.xpose.msra.mxu0 %v949
    %975 = vmatprep.subr.mxu0 0.0
    %976 = vmatpush1.xpose.msra.mxu0 %v948
    %977 = vmatprep.subr.mxu0 0.0
    %978 = vmatpush1.xpose.msra.mxu0 %v947
    %979 = vmatprep.subr.mxu0 0.0
    %980 = vmatpush1.xpose.msra.mxu0 %v946
    %981 = vmatprep.subr.mxu0 0.0
    %982 = vmatpush1.xpose.msra.mxu0 %v945
    %983 = vmatprep.subr.mxu0 0.0
    %984 = vmatpush1.xpose.msra.mxu0 %v944
    %985 = vmatprep.subr.mxu0 0.0
    %986 = vmatpush1.xpose.msra.mxu0 %v943
    %987 = vmatprep.subr.mxu0 0.0
    %988 = vmatpush1.xpose.msra.mxu0 %v942
    %989 = vmatprep.subr.mxu0 0.0
    %990 = vmatpush1.xpose.msra.mxu0 %v941
    %991 = vmatprep.subr.mxu0 0.0
    %992 = vmatpush1.xpose.msra.mxu0 %v940
    %993 = vmatprep.subr.mxu0 0.0
    %994 = vmatpush1.xpose.msra.mxu0 %v939
    %995 = vmatprep.subr.mxu0 0.0
    %996 = vmatpush1.xpose.msra.mxu0 %v938
    %997 = vmatprep.subr.mxu0 0.0
    %998 = vmatpush1.xpose.msra.mxu0 %v937
    %999 = vmatprep.subr.mxu0 0.0
    %1000 = vmatpush1.xpose.msra.mxu0 %v936
    %1001 = vmatprep.subr.mxu0 0.0
    %1002 = vmatpush1.xpose.msra.mxu0 %v935
    %1003 = vmatprep.subr.mxu0 0.0
    %1004 = vmatpush1.xpose.msra.mxu0 %v934
    %1005 = vmatprep.subr.mxu0 0.0
    %1006 = vmatpush2.xpose.msra.mxu0 %v965
    %1007 = vmatprep.subr.mxu0 0.0
    %1008 = vmatpush2.xpose.msra.mxu0 %v964
    %1009 = vmatprep.subr.mxu0 0.0
    %1010 = vmatpush2.xpose.msra.mxu0 %v963
    %1011 = vmatprep.subr.mxu0 0.0
    %1012 = vmatpush2.xpose.msra.mxu0 %v962
    %1013 = vmatprep.subr.mxu0 0.0
    %1014 = vmatpush2.xpose.msra.mxu0 %v961
    %1015 = vmatprep.subr.mxu0 0.0
    %1016 = vmatpush2.xpose.msra.mxu0 %v960
    %1017 = vmatprep.subr.mxu0 0.0
    %1018 = vmatpush2.xpose.msra.mxu0 %v959
    %1019 = vmatprep.subr.mxu0 0.0
    %1020 = vmatpush2.xpose.msra.mxu0 %v958
    %1021 = vmatprep.subr.mxu0 0.0
    %1022 = vmatpush2.xpose.msra.mxu0 %v957
    %1023 = vmatprep.subr.mxu0 0.0
    %1024 = vmatpush2.xpose.msra.mxu0 %v956
    %1025 = vmatprep.subr.mxu0 0.0
    %1026 = vmatpush2.xpose.msra.mxu0 %v955
    %1027 = vmatprep.subr.mxu0 0.0
    %1028 = vmatpush2.xpose.msra.mxu0 %v954
    %1029 = vmatprep.subr.mxu0 0.0
    %1030 = vmatpush2.xpose.msra.mxu0 %v953
    %1031 = vmatprep.subr.mxu0 0.0
    %1032 = vmatpush2.xpose.msra.mxu0 %v952
    %1033 = vmatprep.subr.mxu0 0.0
    %1034 = vmatpush2.xpose.msra.mxu0 %v951
    %1035 = vmatprep.subr.mxu0 0.0
    %1036 = vmatpush2.xpose.msra.mxu0 %v950
    %1037 = vmatprep.mubr.f32.mxu0 0.0
    %1038 = vmatmul.mubr.f32.gmra.mxu0 %v966
    %v1039 = vpop.f32.mrf.mxu0
    %v1040 = vadd.f32 %v971, %v1039
    %v1041 = vpop.f32.mrf.mxu0
    %v1042 = vadd.f32 %v971, %v1041
    %1043 = vdwg.mxu0
    %v1046 = vcombine.low %v1040, %v1042
    %v1048 = vunpack.c.l.s4 1966171168
    %v1049 = vunpack.c.0.s8 %v1048
    %v1050 = vlaneseq
    %v1051 = vshrl.u32 %v1050, 7
    %v1052 = vsub.s32 %v1049, %v1051
    %v1053 = vrot.slane %v1046, %v1052
    %v1055 = vunpack.c.l.s4 1966171168
    %v1056 = vunpack.c.0.s8 %v1055
    %v1057 = vlaneseq
    %v1058 = vshrl.u32 %v1057, 7
    %v1059 = vsub.s32 %v1056, %v1058
    %v1060 = vrot.slane %v1053, %v1059
    %v1062 = vlaneseq
    %vm1063 = vcmp.ge.s32.totalorder %v1062, 0
    %vm1064 = vcmp.lt.s32.totalorder %v1062, 256
    %vm1065 = vmand %vm1063, %vm1064
    %1066 = vst.msk [vmem:[#allocation2] sm:$0x3] %vm1065, %v1060
    // Predicated region
    $region14: #{_forward.1} parent=1 // pred_check
      _
    $region15: #{_forward.1} parent=1 // pred_check_branch
      %1068 = sbr.rel (0) target = $region17
    $region16: #{_forward.1} parent=1 // pred_region
      %s1070 = ssub.s32 32, 32
      %1071 = vsyncadd [#allocation3], %s1070
      %s1073 = sshll.u32 [#allocation2], 4
      %s1074 = int_to_ptr.vmem [resolvable:$true] %s1073
      %1076 = dma.vmem_to_hbm [thread:$0]  %s1074, 32, %s3, [#allocation3]
    $region17: #{_forward.1} parent=1 // pred_fallthru
      _
    // Predicated region
    $region18: #{_forward.1} parent=1 // pred_check
      _
    $region19: #{_forward.1} parent=1 // pred_check_branch
      %1078 = sbr.rel (0) target = $region21
    $region20: #{_forward.1} parent=1 // pred_region
      %1079 = dma.done [#allocation3], 32
    $region21: #{_forward.1} parent=1 // pred_fallthru
      _
    %1080 = vsyncpa [#allocation3], 1

</llo_original>
